<compile_context>
chip_gen: v7x
topology: tpu7x:2x2x1
jax: 0.10.0
libtpu: 0.0.40
codegen_flags: <defaults>
</compile_context>

<pallas_src>
import jax
import jax.numpy as jnp
from jax.experimental import pallas as pl
from jax.experimental.pallas import tpu as pltpu

_EPS = 1e-5  # PyTorch BatchNorm1d default eps


# ---------------------------------------------------------------------------
# Stage 1: neighbourhood aggregation (tiled over points, lane = points)
# ---------------------------------------------------------------------------
def _agg_kernel(xyz_ref, nxyz_ref, nfeat_ref, w_int_ref, b_int_ref, out_ref):
    xyz = xyz_ref[...]        # (3, TN)
    nxyz = nxyz_ref[...]      # (3, S, TN)
    nfeat = nfeat_ref[...]    # (C_in, S, TN)
    w_int = w_int_ref[...]    # (C_in, 3)  -- torch Linear weight layout (out, in)
    b_int = b_int_ref[...]    # (C_in, 1)

    # pos_vector = neighbour xyz - center xyz   -> (3, S, TN), lane-dense.
    pos = nxyz - xyz[:, None, :]

    # intermediate_layer: Linear(3 -> C_in) as three full-lane broadcast MACs:
    # (C_in,1,1) weight column * (1,S,TN) coordinate plane.  No sub-lane slices
    # of the big tensors, no degenerate K=3 MXU contraction.
    h = b_int[:, :, None]                                   # (C_in, 1, 1)
    for k in range(3):
        h = h + w_int[:, k:k + 1][:, :, None] * pos[k:k + 1, :, :]
    h = jnp.maximum(h, 0.0)                                 # (C_in, S, TN)

    # Weighted aggregation over the neighbourhood (sublane reduce over S).
    out_ref[...] = jnp.sum(h * nfeat, axis=1)               # (C_in, TN)


# ---------------------------------------------------------------------------
# Stage 2: feature_layers (Linear/BN/ReLU chain) + residual path, whole-resident
# ---------------------------------------------------------------------------
def _make_dense_kernel(num_feature_layers, n_valid, n_total):
    """Dense stack kernel.  n_valid = real point count, n_total = padded count."""
    need_mask = n_valid != n_total
    inv_n = 1.0 / float(n_valid)

    def kernel(*refs):
        x_ref, feats_ref = refs[0], refs[1]
        idx = 2
        layer_refs = []
        for _ in range(num_feature_layers):
            layer_refs.append(refs[idx:idx + 4])  # (W, b, gamma, beta)
            idx += 4
        wres_ref, bres_ref, gres_ref, beres_ref = refs[idx:idx + 4]
        out_ref = refs[idx + 4]

        if need_mask:
            mask = (jax.lax.broadcasted_iota(jnp.int32, (1, n_total), 1)
                    < n_valid).astype(jnp.float32)
        else:
            mask = None

        def bn_relu(y, g, be):
            # Single-pass BN statistics: var = E[y^2] - mu^2 (biased, training-mode
            # BN).  Padded columns (if any) are excluded via the mask.
            if mask is not None:
                ym = y * mask
                mu = jnp.sum(ym, axis=1, keepdims=True) * inv_n
                ex2 = jnp.sum(ym * y, axis=1, keepdims=True) * inv_n
            else:
                mu = jnp.sum(y, axis=1, keepdims=True) * inv_n
                ex2 = jnp.sum(y * y, axis=1, keepdims=True) * inv_n
            var = ex2 - mu * mu
            return jnp.maximum((y - mu) * jax.lax.rsqrt(var + _EPS) * g + be, 0.0)

        # feature_layers: [Linear -> BN(batch stats) -> ReLU] * L,
        # computed as W(C_next,C_prev) @ x(C_prev,N): MXU output axis = points.
        x = x_ref[...]                                        # (C_in, Np)
        for w_ref, b_ref, g_ref, be_ref in layer_refs:
            x = jnp.dot(w_ref[...], x, preferred_element_type=jnp.float32) + b_ref[...]
            x = bn_relu(x, g_ref[...], be_ref[...])

        # residual_layers: Conv1d(k=1) == per-point Linear over channels, BN, ReLU
        r = (jnp.dot(wres_ref[...], feats_ref[...], preferred_element_type=jnp.float32)
             + bres_ref[...])
        r = bn_relu(r, gres_ref[...], beres_ref[...])

        out_ref[...] = x + r                                  # (C_out, Np), lane-dense store

    return kernel


# ---------------------------------------------------------------------------
# Parameters (torch layouts: Linear weight is (out, in); per-channel vectors (C,1))
# ---------------------------------------------------------------------------
def init_params(key, channels_list):
    c_in, c_out = channels_list[0], channels_list[-1]
    n_layers = len(channels_list) - 1
    keys = iter(jax.random.split(key, 4 + 2 * n_layers))
    params = {
        "w_int": 0.1 * jax.random.normal(next(keys), (c_in, 3), jnp.float32),
        "b_int": 0.1 * jax.random.normal(next(keys), (c_in, 1), jnp.float32),
        "layers": [],
    }
    for i in range(1, len(channels_list)):
        cp, cn = channels_list[i - 1], channels_list[i]
        w = 0.1 * jax.random.normal(next(keys), (cn, cp), jnp.float32)
        b = 0.1 * jax.random.normal(next(keys), (cn, 1), jnp.float32)
        g = jnp.ones((cn, 1), jnp.float32)    # BN gamma default
        be = jnp.zeros((cn, 1), jnp.float32)  # BN beta default
        params["layers"].append((w, b, g, be))
    params["w_res"] = 0.1 * jax.random.normal(next(keys), (c_out, c_in), jnp.float32)
    params["b_res"] = 0.1 * jax.random.normal(next(keys), (c_out, 1), jnp.float32)
    params["g_res"] = jnp.ones((c_out, 1), jnp.float32)
    params["be_res"] = jnp.zeros((c_out, 1), jnp.float32)
    return params


# ---------------------------------------------------------------------------
# Wrapper (PyTorch shapes in/out)
# ---------------------------------------------------------------------------
def spatial_graph_conv(pointcloud_xyz, pointcloud_features, neighbourhood_pointclouds,
                       params, channels_list):
    """xyz (1,N,3), features (1,C_in,N), neigh (1,3+C_in,N,S) -> (1,C_out,N)."""
    assert pointcloud_xyz.shape[0] == 1, "module semantics require batch == 1"
    N = pointcloud_xyz.shape[1]
    S = neighbourhood_pointclouds.shape[-1]
    c_in, c_out = channels_list[0], channels_list[-1]

    # Glue: only the S<->N swap on the neighbourhood and a tiny (N,3)->(3,N)
    # transpose remain; feats and the output are already channels-first.
    xyz = jnp.transpose(pointcloud_xyz[0], (1, 0)).astype(jnp.float32)              # (3, N)
    neigh = jnp.transpose(neighbourhood_pointclouds[0], (0, 2, 1)).astype(jnp.float32)  # (3+C, S, N)
    nxyz = neigh[:3]                                                                 # (3, S, N)
    nfeat = neigh[3:]                                                                # (C_in, S, N)
    feats = pointcloud_features[0].astype(jnp.float32)                               # (C_in, N)

    # Points-axis tile: lane-dense (multiple of 128), >=512 when N allows so the
    # ~0.35us per-grid-step overhead is amortized.  Pad N; padded columns produce
    # zero aggregated features and are masked out of the BN statistics in stage 2.
    if N >= 512:
        TN = 512
    else:
        TN = ((N + 127) // 128) * 128
    Np = ((N + TN - 1) // TN) * TN
    pad = Np - N
    if pad:
        xyz = jnp.pad(xyz, ((0, 0), (0, pad)))
        nxyz = jnp.pad(nxyz, ((0, 0), (0, 0), (0, pad)))
        nfeat = jnp.pad(nfeat, ((0, 0), (0, 0), (0, pad)))
        feats = jnp.pad(feats, ((0, 0), (0, pad)))

    # ---- Stage 1: neighbourhood aggregation, gridded over points ----
    x_agg = pl.pallas_call(
        _agg_kernel,
        out_shape=jax.ShapeDtypeStruct((c_in, Np), jnp.float32),
        grid=(Np // TN,),
        in_specs=[
            pl.BlockSpec((3, TN), lambda i: (0, i)),
            pl.BlockSpec((3, S, TN), lambda i: (0, 0, i)),
            pl.BlockSpec((c_in, S, TN), lambda i: (0, 0, i)),
            pl.BlockSpec((c_in, 3), lambda i: (0, 0)),
            pl.BlockSpec((c_in, 1), lambda i: (0, 0)),
        ],
        out_specs=pl.BlockSpec((c_in, TN), lambda i: (0, i)),
        compiler_params=pltpu.CompilerParams(dimension_semantics=("parallel",)),
    )(xyz, nxyz, nfeat, params["w_int"], params["b_int"])

    # ---- Stage 2: dense stack + residual (needs global-N BN statistics) ----
    flat_params = []
    for layer in params["layers"]:
        flat_params += list(layer)
    flat_params += [params["w_res"], params["b_res"], params["g_res"], params["be_res"]]

    dense_kernel = _make_dense_kernel(len(params["layers"]), N, Np)
    n_inputs = 2 + len(flat_params)

    out = pl.pallas_call(
        dense_kernel,
        out_shape=jax.ShapeDtypeStruct((c_out, Np), jnp.float32),
        in_specs=[pl.BlockSpec(memory_space=pltpu.MemorySpace.VMEM)] * n_inputs,
        out_specs=pl.BlockSpec(memory_space=pltpu.MemorySpace.VMEM),
    )(x_agg, feats, *flat_params)

    out = out[:, :N]
    return out[None]                                                                 # (1, C_out, N)


# ---------------------------------------------------------------------------
# Pure-JAX reference of the PyTorch forward (training-mode BN)
# ---------------------------------------------------------------------------
def reference(pointcloud_xyz, pointcloud_features, neighbourhood, params):
    xyz = pointcloud_xyz[0]                                     # (N, 3)
    neigh = jnp.transpose(neighbourhood[0], (1, 2, 0))          # (N, S, 3+C)
    nxyz, nfeat = neigh[:, :, :3], neigh[:, :, 3:]
    pos = nxyz - xyz[:, None, :]
    h = jnp.maximum(jnp.einsum("nsk,ck->nsc", pos, params["w_int"])
                    + params["b_int"][:, 0][None, None, :], 0.0)
    x = jnp.sum(h * nfeat, axis=1)                              # (N, C_in)
    for w, b, g, be in params["layers"]:
        x = x @ w.T + b[:, 0][None, :]
        mu = jnp.mean(x, axis=0, keepdims=True)
        var = jnp.mean((x - mu) ** 2, axis=0, keepdims=True)
        x = jnp.maximum((x - mu) * jax.lax.rsqrt(var + _EPS) * g[:, 0][None, :]
                        + be[:, 0][None, :], 0.0)
    feats = pointcloud_features[0].T                            # (N, C_in)
    r = feats @ params["w_res"].T + params["b_res"][:, 0][None, :]
    mu = jnp.mean(r, axis=0, keepdims=True)
    var = jnp.mean((r - mu) ** 2, axis=0, keepdims=True)
    r = jnp.maximum((r - mu) * jax.lax.rsqrt(var + _EPS) * params["g_res"][:, 0][None, :]
                    + params["be_res"][:, 0][None, :], 0.0)
    return (x + r).T[None]                                      # (1, C_out, N)


if __name__ == "__main__":
    channels_list = [16, 32, 64]
    B, N, S = 1, 128, 8
    c_in = channels_list[0]

    key = jax.random.PRNGKey(0)
    k1, k2, k3, kp = jax.random.split(key, 4)
    pointcloud_xyz = jax.random.normal(k1, (B, N, 3), jnp.float32)
    pointcloud_features = jax.random.normal(k2, (B, c_in, N), jnp.float32)
    neighbourhood = jax.random.normal(k3, (B, 3 + c_in, N, S), jnp.float32)
    params = init_params(kp, channels_list)

    out = spatial_graph_conv(pointcloud_xyz, pointcloud_features, neighbourhood,
                             params, channels_list)
    out = jax.block_until_ready(out)

    ref = reference(pointcloud_xyz, pointcloud_features, neighbourhood, params)
    assert out.shape == (B, channels_list[-1], N), out.shape
    assert jnp.allclose(out, ref, atol=1e-3, rtol=1e-3), float(jnp.max(jnp.abs(out - ref)))

    # TODO(synk): torch.cuda.empty_cache() has no JAX/TPU equivalent (memory mgmt no-op).
    print("KERNEL_OK")
</pallas_src>

<mosaic_0001>
module attributes {stable_mosaic.version = 11 : i64} {
  func.func @_agg_kernel(%arg0: i32, %arg1: memref<3x128xf32, #tpu.memory_space<vmem>>, %arg2: memref<3x8x128xf32, #tpu.memory_space<vmem>>, %arg3: memref<16x8x128xf32, #tpu.memory_space<vmem>>, %arg4: memref<16x3xf32, #tpu.memory_space<vmem>>, %arg5: memref<16x1xf32, #tpu.memory_space<vmem>>, %arg6: memref<16x128xf32, #tpu.memory_space<vmem>>) attributes {dimension_semantics = [#tpu.dimension_semantics<parallel>], iteration_bounds = array<i64: 1>, scalar_prefetch = 0 : i64, scratch_operands = 0 : i64, tpu.core_type = #tpu.core_type<tc>, window_params = [{transform_indices = @transform_0, window_bounds = array<i64: 3, 128>}, {transform_indices = @transform_1, window_bounds = array<i64: 3, 8, 128>}, {transform_indices = @transform_2, window_bounds = array<i64: 16, 8, 128>}, {pipeline_mode = #tpu.pipeline_mode<synchronous>, transform_indices = @transform_3, window_bounds = array<i64: 16, 3>}, {pipeline_mode = #tpu.pipeline_mode<synchronous>, transform_indices = @transform_4, window_bounds = array<i64: 16, 1>}, {transform_indices = @transform_5, window_bounds = array<i64: 16, 128>}]} {
    %c0 = arith.constant 0 : index
    %c0_0 = arith.constant 0 : index
    %0 = vector.load %arg1[%c0, %c0_0] : memref<3x128xf32, #tpu.memory_space<vmem>>, vector<3x128xf32>
    %c0_1 = arith.constant 0 : index
    %c0_2 = arith.constant 0 : index
    %c0_3 = arith.constant 0 : index
    %1 = vector.load %arg2[%c0_1, %c0_2, %c0_3] : memref<3x8x128xf32, #tpu.memory_space<vmem>>, vector<3x8x128xf32>
    %c0_4 = arith.constant 0 : index
    %c0_5 = arith.constant 0 : index
    %c0_6 = arith.constant 0 : index
    %2 = vector.load %arg3[%c0_4, %c0_5, %c0_6] : memref<16x8x128xf32, #tpu.memory_space<vmem>>, vector<16x8x128xf32>
    %c0_7 = arith.constant 0 : index
    %c0_8 = arith.constant 0 : index
    %3 = vector.load %arg4[%c0_7, %c0_8] : memref<16x3xf32, #tpu.memory_space<vmem>>, vector<16x3xf32>
    %c0_9 = arith.constant 0 : index
    %c0_10 = arith.constant 0 : index
    %4 = vector.load %arg5[%c0_9, %c0_10] : memref<16x1xf32, #tpu.memory_space<vmem>>, vector<16x1xf32>
    %5 = vector.shape_cast %0 : vector<3x128xf32> to vector<3x1x128xf32>
    %6 = vector.broadcast %5 : vector<3x1x128xf32> to vector<3x8x128xf32>
    %7 = arith.subf %1, %6 : vector<3x8x128xf32>
    %8 = vector.shape_cast %4 : vector<16x1xf32> to vector<16x1x1xf32>
    %9 = vector.extract_strided_slice %3 {offsets = [0, 0], sizes = [16, 1], strides = [1, 1]} : vector<16x3xf32> to vector<16x1xf32>
    %10 = vector.shape_cast %9 : vector<16x1xf32> to vector<16x1x1xf32>
    %11 = vector.extract_strided_slice %7 {offsets = [0, 0, 0], sizes = [1, 8, 128], strides = [1, 1, 1]} : vector<3x8x128xf32> to vector<1x8x128xf32>
    %12 = vector.broadcast %10 : vector<16x1x1xf32> to vector<16x8x128xf32>
    %13 = vector.broadcast %11 : vector<1x8x128xf32> to vector<16x8x128xf32>
    %14 = arith.mulf %12, %13 : vector<16x8x128xf32>
    %15 = vector.broadcast %8 : vector<16x1x1xf32> to vector<16x8x128xf32>
    %16 = arith.addf %15, %14 : vector<16x8x128xf32>
    %17 = vector.extract_strided_slice %3 {offsets = [0, 1], sizes = [16, 1], strides = [1, 1]} : vector<16x3xf32> to vector<16x1xf32>
    %18 = vector.shape_cast %17 : vector<16x1xf32> to vector<16x1x1xf32>
    %19 = vector.extract_strided_slice %7 {offsets = [1, 0, 0], sizes = [1, 8, 128], strides = [1, 1, 1]} : vector<3x8x128xf32> to vector<1x8x128xf32>
    %20 = vector.broadcast %18 : vector<16x1x1xf32> to vector<16x8x128xf32>
    %21 = vector.broadcast %19 : vector<1x8x128xf32> to vector<16x8x128xf32>
    %22 = arith.mulf %20, %21 : vector<16x8x128xf32>
    %23 = arith.addf %16, %22 : vector<16x8x128xf32>
    %24 = vector.extract_strided_slice %3 {offsets = [0, 2], sizes = [16, 1], strides = [1, 1]} : vector<16x3xf32> to vector<16x1xf32>
    %25 = vector.shape_cast %24 : vector<16x1xf32> to vector<16x1x1xf32>
    %26 = vector.extract_strided_slice %7 {offsets = [2, 0, 0], sizes = [1, 8, 128], strides = [1, 1, 1]} : vector<3x8x128xf32> to vector<1x8x128xf32>
    %27 = vector.broadcast %25 : vector<16x1x1xf32> to vector<16x8x128xf32>
    %28 = vector.broadcast %26 : vector<1x8x128xf32> to vector<16x8x128xf32>
    %29 = arith.mulf %27, %28 : vector<16x8x128xf32>
    %30 = arith.addf %23, %29 : vector<16x8x128xf32>
    %cst = arith.constant 0.000000e+00 : f32
    %31 = vector.broadcast %cst : f32 to vector<16x8x128xf32>
    %32 = arith.maximumf %30, %31 : vector<16x8x128xf32>
    %33 = arith.mulf %32, %2 : vector<16x8x128xf32>
    %cst_11 = arith.constant dense<0.000000e+00> : vector<16x128xf32>
    %34 = vector.multi_reduction <add>, %33, %cst_11 [1] : vector<16x8x128xf32> to vector<16x128xf32>
    %c0_12 = arith.constant 0 : index
    %c0_13 = arith.constant 0 : index
    %35 = vector.load %arg6[%c0_12, %c0_13] : memref<16x128xf32, #tpu.memory_space<vmem>>, vector<16x128xf32>
    tpu.vector_store %arg6[%c0_12, %c0_13], %34 {strides = array<i32>} : memref<16x128xf32, #tpu.memory_space<vmem>>, vector<16x128xf32>,
    return
  }
  func.func @transform_0(%arg0: i32) -> (i32, i32) {
    %c0_i32 = arith.constant 0 : i32
    %c0_i32_0 = arith.constant 0 : i32
    return %c0_i32, %arg0 : i32, i32
  }
  func.func @transform_1(%arg0: i32) -> (i32, i32, i32) {
    %c0_i32 = arith.constant 0 : i32
    %c0_i32_0 = arith.constant 0 : i32
    %c0_i32_1 = arith.constant 0 : i32
    return %c0_i32, %c0_i32_0, %arg0 : i32, i32, i32
  }
  func.func @transform_2(%arg0: i32) -> (i32, i32, i32) {
    %c0_i32 = arith.constant 0 : i32
    %c0_i32_0 = arith.constant 0 : i32
    %c0_i32_1 = arith.constant 0 : i32
    return %c0_i32, %c0_i32_0, %arg0 : i32, i32, i32
  }
  func.func @transform_3(%arg0: i32) -> (i32, i32) {
    %c0_i32 = arith.constant 0 : i32
    %c0_i32_0 = arith.constant 0 : i32
    %c0_i32_1 = arith.constant 0 : i32
    return %c0_i32, %c0_i32_0 : i32, i32
  }
  func.func @transform_4(%arg0: i32) -> (i32, i32) {
    %c0_i32 = arith.constant 0 : i32
    %c0_i32_0 = arith.constant 0 : i32
    %c0_i32_1 = arith.constant 0 : i32
    return %c0_i32, %c0_i32_0 : i32, i32
  }
  func.func @transform_5(%arg0: i32) -> (i32, i32) {
    %c0_i32 = arith.constant 0 : i32
    %c0_i32_0 = arith.constant 0 : i32
    return %c0_i32, %arg0 : i32, i32
  }
}

</mosaic_0001>

<llo_original>
// kernel: tpu_custom_call.1
$region0: #{tpu_custom_call.1}
  #allocation0 [shape = 'u32[]', space=smem, size = 0x4, offset = 0x4, fixed_abs, tag = 'smem constant byte address 0x4 - core index']
  #allocation1 [shape = 'u32[144,128]{1,0:T(1,128)}', space=vmem, size = 0x12000, scoped, tag = 'internal scratch']
  %s0 = inlined_call_operand.vmem [shape: f32[3,128], index: 0, kind: input, shape index: {}]
  %s1 = inlined_call_operand.vmem [shape: f32[3,8,128], index: 1, kind: input, shape index: {}]
  %s2 = inlined_call_operand.hbm [shape: f32[16,8,128], index: 2, kind: input, shape index: {}]
  %s3 = inlined_call_operand.vmem [shape: f32[16,3], index: 3, kind: input, shape index: {}]
  %s4 = inlined_call_operand.vmem [shape: f32[16,1], index: 4, kind: input, shape index: {}]
  %s5 = inlined_call_operand.hbm [shape: f32[16,128], index: 5, kind: output, shape index: {}]
  %s6 = sld [smem:[#allocation0]]
  $region34: #{tpu_custom_call.1} parent=0
    _
  %s8 = ssub.s32 1, %s6
  %s9 = scalar_select 0, %s8, %s6
  $region1: #{tpu_custom_call.1} parent=0
    #allocation2 [shape = 'u8[65536]{0}', space=vmem, size = 0x10000, scoped, tag = 'input window, operand 2, single buffered']
    #allocation3 [shape = 's32[1]{0}', space=sflag, size = 0x4, scoped, tag = 'scoped memory for tpu_custom_call.1']
    #allocation4 [shape = 's32[1]{0}', space=sflag, size = 0x4, scoped, tag = 'scoped memory for tpu_custom_call.1']
    #allocation5 [shape = 'u8[8192]{0}', space=vmem, size = 0x2000, scoped, tag = 'output window, operand 0, single buffered']
    %10 = vsyncpa [#allocation3], 0
    %11 = vsyncpa [#allocation4], 0
    // Predicated region
    $region2: #{tpu_custom_call.1} parent=1 // pred_check
      _
    $region3: #{tpu_custom_call.1} parent=1 // pred_check_branch
      %13 = sbr.rel (0) target = $region5
    $region4: #{tpu_custom_call.1} parent=1 // pred_region
      _
    $region5: #{tpu_custom_call.1} parent=1 // pred_fallthru
      _
    // Predicated region
    $region6: #{tpu_custom_call.1} parent=1 // pred_check
      _
    $region7: #{tpu_custom_call.1} parent=1 // pred_check_branch
      %15 = sbr.rel (0) target = $region9
    $region8: #{tpu_custom_call.1} parent=1 // pred_region
      _
    $region9: #{tpu_custom_call.1} parent=1 // pred_fallthru
      _
    // Predicated region
    $region10: #{tpu_custom_call.1} parent=1 // pred_check
      _
    $region11: #{tpu_custom_call.1} parent=1 // pred_check_branch
      %17 = sbr.rel (0) target = $region13
    $region12: #{tpu_custom_call.1} parent=1 // pred_region
      %s19 = ssub.s32 2048, 2048
      %20 = vsyncadd [#allocation3], %s19
      %s21 = sshll.u32 [#allocation2], 4
      %s22 = int_to_ptr.vmem [resolvable:$true] %s21
      %27 = dma.hbm_to_vmem [thread:$0]  %s2, 2048, %s22, [#allocation3], 128, 128, 8
    $region13: #{tpu_custom_call.1} parent=1 // pred_fallthru
      _
    // Predicated region
    $region14: #{tpu_custom_call.1} parent=1 // pred_check
      _
    $region15: #{tpu_custom_call.1} parent=1 // pred_check_branch
      %29 = sbr.rel (0) target = $region17
    $region16: #{tpu_custom_call.1} parent=1 // pred_region
      _
    $region17: #{tpu_custom_call.1} parent=1 // pred_fallthru
      _
    // Predicated region
    $region18: #{tpu_custom_call.1} parent=1 // pred_check
      _
    $region19: #{tpu_custom_call.1} parent=1 // pred_check_branch
      %31 = sbr.rel (0) target = $region21
    $region20: #{tpu_custom_call.1} parent=1 // pred_region
      _
    $region21: #{tpu_custom_call.1} parent=1 // pred_fallthru
      _
    // Predicated region
    $region22: #{tpu_custom_call.1} parent=1 // pred_check
      _
    $region23: #{tpu_custom_call.1} parent=1 // pred_check_branch
      %33 = sbr.rel (0) target = $region25
    $region24: #{tpu_custom_call.1} parent=1 // pred_region
      %34 = dma.done [#allocation3], 2048
    $region25: #{tpu_custom_call.1} parent=1 // pred_fallthru
      _
    %v35 = vld [vmem:[%s0] sm:$0x7]
    %v36 = vld [vmem:[%s1] sm:$0xff]
    %v37 = vld [vmem:[%s1 + $0x8] sm:$0xff]
    %v38 = vld [vmem:[%s1 + $0x10] sm:$0xff]
    %v39 = vld [vmem:[#allocation2] sm:$0xff]
    %v40 = vld [vmem:[#allocation2 + $0x8] sm:$0xff]
    %v41 = vld [vmem:[#allocation2 + $0x10] sm:$0xff]
    %v42 = vld [vmem:[#allocation2 + $0x18] sm:$0xff]
    %v43 = vld [vmem:[#allocation2 + $0x20] sm:$0xff]
    %v44 = vld [vmem:[#allocation2 + $0x28] sm:$0xff]
    %v45 = vld [vmem:[#allocation2 + $0x30] sm:$0xff]
    %v46 = vld [vmem:[#allocation2 + $0x38] sm:$0xff]
    %v47 = vld [vmem:[#allocation2 + $0x40] sm:$0xff]
    %v48 = vld [vmem:[#allocation2 + $0x48] sm:$0xff]
    %v49 = vld [vmem:[#allocation2 + $0x50] sm:$0xff]
    %v50 = vld [vmem:[#allocation2 + $0x58] sm:$0xff]
    %v51 = vld [vmem:[#allocation2 + $0x60] sm:$0xff]
    %v52 = vld [vmem:[#allocation2 + $0x68] sm:$0xff]
    %v53 = vld [vmem:[#allocation2 + $0x70] sm:$0xff]
    %v54 = vld [vmem:[#allocation2 + $0x78] sm:$0xff]
    %v55 = vld [vmem:[%s3] sm:$0xff]
    %v56 = vld [vmem:[%s3 + $0x8] sm:$0xff]
    %v57 = vld [vmem:[%s4] sm:$0xff]
    %v58 = vld [vmem:[%s4 + $0x8] sm:$0xff]
    %v61 = vunpack.c.l.s4 1966171168
    %v62 = vunpack.c.0.s8 %v61
    %v63 = vlaneseq
    %v64 = vshrl.u32 %v63, 7
    %v65 = vsub.s32 %v62, %v64
    %v66 = vrot.slane %v35, %v65
    %v67 = vcombine.high %v66, %v66
    %v69 = vunpack.c.l.s4 1966171168
    %v70 = vunpack.c.0.s8 %v69
    %v71 = vlaneseq
    %v72 = vshrl.u32 %v71, 7
    %v73 = vsub.s32 %v70, %v72
    %v74 = vrot.slane %v66, %v73
    %v76 = vunpack.c.l.s4 1966171168
    %v77 = vunpack.c.0.s8 %v76
    %v78 = vlaneseq
    %v79 = vshrl.u32 %v78, 7
    %v80 = vsub.s32 %v77, %v79
    %v81 = vrot.slane %v67, %v80
    %v82 = vcombine.high %v74, %v74
    %v83 = vlaneseq
    %v84 = vshrl.u32 %v83, 7
    %v85 = vsub.s32 0, %v84
    %v86 = vrot.slane %v74, %v85
    %v87 = vlaneseq
    %v88 = vshrl.u32 %v87, 7
    %v89 = vsub.s32 0, %v88
    %v90 = vrot.slane %v81, %v89
    %v91 = vlaneseq
    %v92 = vshrl.u32 %v91, 7
    %v93 = vsub.s32 0, %v92
    %v94 = vrot.slane %v82, %v93
    %v98 = vsub.f32 %v36, %v86
    %v99 = vsub.f32 %v37, %v90
    %v100 = vsub.f32 %v38, %v94
    %v103 = vcombine.high %v57, %v57
    %v105 = vunpack.c.l.s4 1966171168
    %v106 = vunpack.c.0.s8 %v105
    %v107 = vlaneseq
    %v108 = vshrl.u32 %v107, 7
    %v109 = vsub.s32 %v106, %v108
    %v110 = vrot.slane %v57, %v109
    %v112 = vunpack.c.l.s4 1966171168
    %v113 = vunpack.c.0.s8 %v112
    %v114 = vlaneseq
    %v115 = vshrl.u32 %v114, 7
    %v116 = vsub.s32 %v113, %v115
    %v117 = vrot.slane %v103, %v116
    %v118 = vcombine.high %v110, %v110
    %v119 = vcombine.high %v117, %v117
    %v121 = vunpack.c.l.s4 1966171168
    %v122 = vunpack.c.0.s8 %v121
    %v123 = vlaneseq
    %v124 = vshrl.u32 %v123, 7
    %v125 = vsub.s32 %v122, %v124
    %v126 = vrot.slane %v110, %v125
    %v128 = vunpack.c.l.s4 1966171168
    %v129 = vunpack.c.0.s8 %v128
    %v130 = vlaneseq
    %v131 = vshrl.u32 %v130, 7
    %v132 = vsub.s32 %v129, %v131
    %v133 = vrot.slane %v117, %v132
    %v135 = vunpack.c.l.s4 1966171168
    %v136 = vunpack.c.0.s8 %v135
    %v137 = vlaneseq
    %v138 = vshrl.u32 %v137, 7
    %v139 = vsub.s32 %v136, %v138
    %v140 = vrot.slane %v118, %v139
    %v142 = vunpack.c.l.s4 1966171168
    %v143 = vunpack.c.0.s8 %v142
    %v144 = vlaneseq
    %v145 = vshrl.u32 %v144, 7
    %v146 = vsub.s32 %v143, %v145
    %v147 = vrot.slane %v119, %v146
    %v148 = vcombine.high %v126, %v126
    %v149 = vcombine.high %v133, %v133
    %v150 = vcombine.high %v140, %v140
    %v151 = vcombine.high %v147, %v147
    %v152 = vcombine.high %v58, %v58
    %v154 = vunpack.c.l.s4 1966171168
    %v155 = vunpack.c.0.s8 %v154
    %v156 = vlaneseq
    %v157 = vshrl.u32 %v156, 7
    %v158 = vsub.s32 %v155, %v157
    %v159 = vrot.slane %v58, %v158
    %v161 = vunpack.c.l.s4 1966171168
    %v162 = vunpack.c.0.s8 %v161
    %v163 = vlaneseq
    %v164 = vshrl.u32 %v163, 7
    %v165 = vsub.s32 %v162, %v164
    %v166 = vrot.slane %v152, %v165
    %v167 = vcombine.high %v159, %v159
    %v168 = vcombine.high %v166, %v166
    %v170 = vunpack.c.l.s4 1966171168
    %v171 = vunpack.c.0.s8 %v170
    %v172 = vlaneseq
    %v173 = vshrl.u32 %v172, 7
    %v174 = vsub.s32 %v171, %v173
    %v175 = vrot.slane %v159, %v174
    %v177 = vunpack.c.l.s4 1966171168
    %v178 = vunpack.c.0.s8 %v177
    %v179 = vlaneseq
    %v180 = vshrl.u32 %v179, 7
    %v181 = vsub.s32 %v178, %v180
    %v182 = vrot.slane %v166, %v181
    %v184 = vunpack.c.l.s4 1966171168
    %v185 = vunpack.c.0.s8 %v184
    %v186 = vlaneseq
    %v187 = vshrl.u32 %v186, 7
    %v188 = vsub.s32 %v185, %v187
    %v189 = vrot.slane %v167, %v188
    %v191 = vunpack.c.l.s4 1966171168
    %v192 = vunpack.c.0.s8 %v191
    %v193 = vlaneseq
    %v194 = vshrl.u32 %v193, 7
    %v195 = vsub.s32 %v192, %v194
    %v196 = vrot.slane %v168, %v195
    %v197 = vcombine.high %v175, %v175
    %v198 = vcombine.high %v182, %v182
    %v199 = vcombine.high %v189, %v189
    %v200 = vcombine.high %v196, %v196
    %v203 = vcombine.high %v55, %v55
    %v205 = vunpack.c.l.s4 1966171168
    %v206 = vunpack.c.0.s8 %v205
    %v207 = vlaneseq
    %v208 = vshrl.u32 %v207, 7
    %v209 = vsub.s32 %v206, %v208
    %v210 = vrot.slane %v55, %v209
    %v212 = vunpack.c.l.s4 1966171168
    %v213 = vunpack.c.0.s8 %v212
    %v214 = vlaneseq
    %v215 = vshrl.u32 %v214, 7
    %v216 = vsub.s32 %v213, %v215
    %v217 = vrot.slane %v203, %v216
    %v218 = vcombine.high %v210, %v210
    %v219 = vcombine.high %v217, %v217
    %v221 = vunpack.c.l.s4 1966171168
    %v222 = vunpack.c.0.s8 %v221
    %v223 = vlaneseq
    %v224 = vshrl.u32 %v223, 7
    %v225 = vsub.s32 %v222, %v224
    %v226 = vrot.slane %v210, %v225
    %v228 = vunpack.c.l.s4 1966171168
    %v229 = vunpack.c.0.s8 %v228
    %v230 = vlaneseq
    %v231 = vshrl.u32 %v230, 7
    %v232 = vsub.s32 %v229, %v231
    %v233 = vrot.slane %v217, %v232
    %v235 = vunpack.c.l.s4 1966171168
    %v236 = vunpack.c.0.s8 %v235
    %v237 = vlaneseq
    %v238 = vshrl.u32 %v237, 7
    %v239 = vsub.s32 %v236, %v238
    %v240 = vrot.slane %v218, %v239
    %v242 = vunpack.c.l.s4 1966171168
    %v243 = vunpack.c.0.s8 %v242
    %v244 = vlaneseq
    %v245 = vshrl.u32 %v244, 7
    %v246 = vsub.s32 %v243, %v245
    %v247 = vrot.slane %v219, %v246
    %v248 = vcombine.high %v226, %v226
    %v249 = vcombine.high %v233, %v233
    %v250 = vcombine.high %v240, %v240
    %v251 = vcombine.high %v247, %v247
    %v252 = vcombine.high %v56, %v56
    %v254 = vunpack.c.l.s4 1966171168
    %v255 = vunpack.c.0.s8 %v254
    %v256 = vlaneseq
    %v257 = vshrl.u32 %v256, 7
    %v258 = vsub.s32 %v255, %v257
    %v259 = vrot.slane %v56, %v258
    %v261 = vunpack.c.l.s4 1966171168
    %v262 = vunpack.c.0.s8 %v261
    %v263 = vlaneseq
    %v264 = vshrl.u32 %v263, 7
    %v265 = vsub.s32 %v262, %v264
    %v266 = vrot.slane %v252, %v265
    %v267 = vcombine.high %v259, %v259
    %v268 = vcombine.high %v266, %v266
    %v270 = vunpack.c.l.s4 1966171168
    %v271 = vunpack.c.0.s8 %v270
    %v272 = vlaneseq
    %v273 = vshrl.u32 %v272, 7
    %v274 = vsub.s32 %v271, %v273
    %v275 = vrot.slane %v259, %v274
    %v277 = vunpack.c.l.s4 1966171168
    %v278 = vunpack.c.0.s8 %v277
    %v279 = vlaneseq
    %v280 = vshrl.u32 %v279, 7
    %v281 = vsub.s32 %v278, %v280
    %v282 = vrot.slane %v266, %v281
    %v284 = vunpack.c.l.s4 1966171168
    %v285 = vunpack.c.0.s8 %v284
    %v286 = vlaneseq
    %v287 = vshrl.u32 %v286, 7
    %v288 = vsub.s32 %v285, %v287
    %v289 = vrot.slane %v267, %v288
    %v291 = vunpack.c.l.s4 1966171168
    %v292 = vunpack.c.0.s8 %v291
    %v293 = vlaneseq
    %v294 = vshrl.u32 %v293, 7
    %v295 = vsub.s32 %v292, %v294
    %v296 = vrot.slane %v268, %v295
    %v297 = vcombine.high %v275, %v275
    %v298 = vcombine.high %v282, %v282
    %v299 = vcombine.high %v289, %v289
    %v300 = vcombine.high %v296, %v296
    %v301 = vlaneseq
    %v302 = vshrl.u32 %v301, 7
    %v303 = vsub.s32 0, %v302
    %v304 = vrot.slane %v226, %v303
    %v305 = vlaneseq
    %v306 = vshrl.u32 %v305, 7
    %v307 = vsub.s32 0, %v306
    %v308 = vrot.slane %v240, %v307
    %v309 = vlaneseq
    %v310 = vshrl.u32 %v309, 7
    %v311 = vsub.s32 0, %v310
    %v312 = vrot.slane %v248, %v311
    %v313 = vlaneseq
    %v314 = vshrl.u32 %v313, 7
    %v315 = vsub.s32 0, %v314
    %v316 = vrot.slane %v250, %v315
    %v317 = vlaneseq
    %v318 = vshrl.u32 %v317, 7
    %v319 = vsub.s32 0, %v318
    %v320 = vrot.slane %v233, %v319
    %v321 = vlaneseq
    %v322 = vshrl.u32 %v321, 7
    %v323 = vsub.s32 0, %v322
    %v324 = vrot.slane %v247, %v323
    %v325 = vlaneseq
    %v326 = vshrl.u32 %v325, 7
    %v327 = vsub.s32 0, %v326
    %v328 = vrot.slane %v249, %v327
    %v329 = vlaneseq
    %v330 = vshrl.u32 %v329, 7
    %v331 = vsub.s32 0, %v330
    %v332 = vrot.slane %v251, %v331
    %v333 = vlaneseq
    %v334 = vshrl.u32 %v333, 7
    %v335 = vsub.s32 0, %v334
    %v336 = vrot.slane %v275, %v335
    %v337 = vlaneseq
    %v338 = vshrl.u32 %v337, 7
    %v339 = vsub.s32 0, %v338
    %v340 = vrot.slane %v289, %v339
    %v341 = vlaneseq
    %v342 = vshrl.u32 %v341, 7
    %v343 = vsub.s32 0, %v342
    %v344 = vrot.slane %v297, %v343
    %v345 = vlaneseq
    %v346 = vshrl.u32 %v345, 7
    %v347 = vsub.s32 0, %v346
    %v348 = vrot.slane %v299, %v347
    %v349 = vlaneseq
    %v350 = vshrl.u32 %v349, 7
    %v351 = vsub.s32 0, %v350
    %v352 = vrot.slane %v282, %v351
    %v353 = vlaneseq
    %v354 = vshrl.u32 %v353, 7
    %v355 = vsub.s32 0, %v354
    %v356 = vrot.slane %v296, %v355
    %v357 = vlaneseq
    %v358 = vshrl.u32 %v357, 7
    %v359 = vsub.s32 0, %v358
    %v360 = vrot.slane %v298, %v359
    %v361 = vlaneseq
    %v362 = vshrl.u32 %v361, 7
    %v363 = vsub.s32 0, %v362
    %v364 = vrot.slane %v300, %v363
    %365 = vset.pattern.permute.xlu0 0
    %366 = vperm.xlu0 %365, %v304
    %v367 = vpop.permute.xlu0 %366
    %369 = vset.pattern.permute.xlu0 0
    %370 = vperm.xlu0 %369, %v308
    %v371 = vpop.permute.xlu0 %370
    %373 = vset.pattern.permute.xlu0 0
    %374 = vperm.xlu0 %373, %v312
    %v375 = vpop.permute.xlu0 %374
    %377 = vset.pattern.permute.xlu0 0
    %378 = vperm.xlu0 %377, %v316
    %v379 = vpop.permute.xlu0 %378
    %381 = vset.pattern.permute.xlu0 0
    %382 = vperm.xlu0 %381, %v320
    %v383 = vpop.permute.xlu0 %382
    %385 = vset.pattern.permute.xlu0 0
    %386 = vperm.xlu0 %385, %v324
    %v387 = vpop.permute.xlu0 %386
    %389 = vset.pattern.permute.xlu0 0
    %390 = vperm.xlu0 %389, %v328
    %v391 = vpop.permute.xlu0 %390
    %393 = vset.pattern.permute.xlu0 0
    %394 = vperm.xlu0 %393, %v332
    %v395 = vpop.permute.xlu0 %394
    %397 = vset.pattern.permute.xlu0 0
    %398 = vperm.xlu0 %397, %v336
    %v399 = vpop.permute.xlu0 %398
    %401 = vset.pattern.permute.xlu0 0
    %402 = vperm.xlu0 %401, %v340
    %v403 = vpop.permute.xlu0 %402
    %405 = vset.pattern.permute.xlu0 0
    %406 = vperm.xlu0 %405, %v344
    %v407 = vpop.permute.xlu0 %406
    %409 = vset.pattern.permute.xlu0 0
    %410 = vperm.xlu0 %409, %v348
    %v411 = vpop.permute.xlu0 %410
    %413 = vset.pattern.permute.xlu0 0
    %414 = vperm.xlu0 %413, %v352
    %v415 = vpop.permute.xlu0 %414
    %417 = vset.pattern.permute.xlu0 0
    %418 = vperm.xlu0 %417, %v356
    %v419 = vpop.permute.xlu0 %418
    %421 = vset.pattern.permute.xlu0 0
    %422 = vperm.xlu0 %421, %v360
    %v423 = vpop.permute.xlu0 %422
    %425 = vset.pattern.permute.xlu0 0
    %426 = vperm.xlu0 %425, %v364
    %v427 = vpop.permute.xlu0 %426
    %v429 = vmul.f32 %v367, %v98
    %v430 = vmul.f32 %v371, %v98
    %v431 = vmul.f32 %v375, %v98
    %v432 = vmul.f32 %v379, %v98
    %v433 = vmul.f32 %v383, %v98
    %v434 = vmul.f32 %v387, %v98
    %v435 = vmul.f32 %v391, %v98
    %v436 = vmul.f32 %v395, %v98
    %v437 = vmul.f32 %v399, %v98
    %v438 = vmul.f32 %v403, %v98
    %v439 = vmul.f32 %v407, %v98
    %v440 = vmul.f32 %v411, %v98
    %v441 = vmul.f32 %v415, %v98
    %v442 = vmul.f32 %v419, %v98
    %v443 = vmul.f32 %v423, %v98
    %v444 = vmul.f32 %v427, %v98
    %v445 = vlaneseq
    %v446 = vshrl.u32 %v445, 7
    %v447 = vsub.s32 0, %v446
    %v448 = vrot.slane %v126, %v447
    %v449 = vlaneseq
    %v450 = vshrl.u32 %v449, 7
    %v451 = vsub.s32 0, %v450
    %v452 = vrot.slane %v140, %v451
    %v453 = vlaneseq
    %v454 = vshrl.u32 %v453, 7
    %v455 = vsub.s32 0, %v454
    %v456 = vrot.slane %v148, %v455
    %v457 = vlaneseq
    %v458 = vshrl.u32 %v457, 7
    %v459 = vsub.s32 0, %v458
    %v460 = vrot.slane %v150, %v459
    %v461 = vlaneseq
    %v462 = vshrl.u32 %v461, 7
    %v463 = vsub.s32 0, %v462
    %v464 = vrot.slane %v133, %v463
    %v465 = vlaneseq
    %v466 = vshrl.u32 %v465, 7
    %v467 = vsub.s32 0, %v466
    %v468 = vrot.slane %v147, %v467
    %v469 = vlaneseq
    %v470 = vshrl.u32 %v469, 7
    %v471 = vsub.s32 0, %v470
    %v472 = vrot.slane %v149, %v471
    %v473 = vlaneseq
    %v474 = vshrl.u32 %v473, 7
    %v475 = vsub.s32 0, %v474
    %v476 = vrot.slane %v151, %v475
    %v477 = vlaneseq
    %v478 = vshrl.u32 %v477, 7
    %v479 = vsub.s32 0, %v478
    %v480 = vrot.slane %v175, %v479
    %v481 = vlaneseq
    %v482 = vshrl.u32 %v481, 7
    %v483 = vsub.s32 0, %v482
    %v484 = vrot.slane %v189, %v483
    %v485 = vlaneseq
    %v486 = vshrl.u32 %v485, 7
    %v487 = vsub.s32 0, %v486
    %v488 = vrot.slane %v197, %v487
    %v489 = vlaneseq
    %v490 = vshrl.u32 %v489, 7
    %v491 = vsub.s32 0, %v490
    %v492 = vrot.slane %v199, %v491
    %v493 = vlaneseq
    %v494 = vshrl.u32 %v493, 7
    %v495 = vsub.s32 0, %v494
    %v496 = vrot.slane %v182, %v495
    %v497 = vlaneseq
    %v498 = vshrl.u32 %v497, 7
    %v499 = vsub.s32 0, %v498
    %v500 = vrot.slane %v196, %v499
    %v501 = vlaneseq
    %v502 = vshrl.u32 %v501, 7
    %v503 = vsub.s32 0, %v502
    %v504 = vrot.slane %v198, %v503
    %v505 = vlaneseq
    %v506 = vshrl.u32 %v505, 7
    %v507 = vsub.s32 0, %v506
    %v508 = vrot.slane %v200, %v507
    %509 = vset.pattern.permute.xlu0 0
    %510 = vperm.xlu0 %509, %v448
    %v511 = vpop.permute.xlu0 %510
    %513 = vset.pattern.permute.xlu0 0
    %514 = vperm.xlu0 %513, %v452
    %v515 = vpop.permute.xlu0 %514
    %517 = vset.pattern.permute.xlu0 0
    %518 = vperm.xlu0 %517, %v456
    %v519 = vpop.permute.xlu0 %518
    %521 = vset.pattern.permute.xlu0 0
    %522 = vperm.xlu0 %521, %v460
    %v523 = vpop.permute.xlu0 %522
    %525 = vset.pattern.permute.xlu0 0
    %526 = vperm.xlu0 %525, %v464
    %v527 = vpop.permute.xlu0 %526
    %529 = vset.pattern.permute.xlu0 0
    %530 = vperm.xlu0 %529, %v468
    %v531 = vpop.permute.xlu0 %530
    %533 = vset.pattern.permute.xlu0 0
    %534 = vperm.xlu0 %533, %v472
    %v535 = vpop.permute.xlu0 %534
    %537 = vset.pattern.permute.xlu0 0
    %538 = vperm.xlu0 %537, %v476
    %v539 = vpop.permute.xlu0 %538
    %541 = vset.pattern.permute.xlu0 0
    %542 = vperm.xlu0 %541, %v480
    %v543 = vpop.permute.xlu0 %542
    %545 = vset.pattern.permute.xlu0 0
    %546 = vperm.xlu0 %545, %v484
    %v547 = vpop.permute.xlu0 %546
    %549 = vset.pattern.permute.xlu0 0
    %550 = vperm.xlu0 %549, %v488
    %v551 = vpop.permute.xlu0 %550
    %553 = vset.pattern.permute.xlu0 0
    %554 = vperm.xlu0 %553, %v492
    %v555 = vpop.permute.xlu0 %554
    %557 = vset.pattern.permute.xlu0 0
    %558 = vperm.xlu0 %557, %v496
    %v559 = vpop.permute.xlu0 %558
    %561 = vset.pattern.permute.xlu0 0
    %562 = vperm.xlu0 %561, %v500
    %v563 = vpop.permute.xlu0 %562
    %565 = vset.pattern.permute.xlu0 0
    %566 = vperm.xlu0 %565, %v504
    %v567 = vpop.permute.xlu0 %566
    %569 = vset.pattern.permute.xlu0 0
    %570 = vperm.xlu0 %569, %v508
    %v571 = vpop.permute.xlu0 %570
    %v573 = vadd.f32 %v511, %v429
    %v574 = vadd.f32 %v515, %v430
    %v575 = vadd.f32 %v519, %v431
    %v576 = vadd.f32 %v523, %v432
    %v577 = vadd.f32 %v527, %v433
    %v578 = vadd.f32 %v531, %v434
    %v579 = vadd.f32 %v535, %v435
    %v580 = vadd.f32 %v539, %v436
    %v581 = vadd.f32 %v543, %v437
    %v582 = vadd.f32 %v547, %v438
    %v583 = vadd.f32 %v551, %v439
    %v584 = vadd.f32 %v555, %v440
    %v585 = vadd.f32 %v559, %v441
    %v586 = vadd.f32 %v563, %v442
    %v587 = vadd.f32 %v567, %v443
    %v588 = vadd.f32 %v571, %v444
    %589 = vset.pattern.permute.xlu0 1
    %590 = vperm.xlu0 %589, %v304
    %v591 = vpop.permute.xlu0 %590
    %593 = vset.pattern.permute.xlu0 1
    %594 = vperm.xlu0 %593, %v308
    %v595 = vpop.permute.xlu0 %594
    %597 = vset.pattern.permute.xlu0 1
    %598 = vperm.xlu0 %597, %v312
    %v599 = vpop.permute.xlu0 %598
    %601 = vset.pattern.permute.xlu0 1
    %602 = vperm.xlu0 %601, %v316
    %v603 = vpop.permute.xlu0 %602
    %605 = vset.pattern.permute.xlu0 1
    %606 = vperm.xlu0 %605, %v320
    %v607 = vpop.permute.xlu0 %606
    %609 = vset.pattern.permute.xlu0 1
    %610 = vperm.xlu0 %609, %v324
    %v611 = vpop.permute.xlu0 %610
    %613 = vset.pattern.permute.xlu0 1
    %614 = vperm.xlu0 %613, %v328
    %v615 = vpop.permute.xlu0 %614
    %617 = vset.pattern.permute.xlu0 1
    %618 = vperm.xlu0 %617, %v332
    %v619 = vpop.permute.xlu0 %618
    %621 = vset.pattern.permute.xlu0 1
    %622 = vperm.xlu0 %621, %v336
    %v623 = vpop.permute.xlu0 %622
    %625 = vset.pattern.permute.xlu0 1
    %626 = vperm.xlu0 %625, %v340
    %v627 = vpop.permute.xlu0 %626
    %629 = vset.pattern.permute.xlu0 1
    %630 = vperm.xlu0 %629, %v344
    %v631 = vpop.permute.xlu0 %630
    %633 = vset.pattern.permute.xlu0 1
    %634 = vperm.xlu0 %633, %v348
    %v635 = vpop.permute.xlu0 %634
    %637 = vset.pattern.permute.xlu0 1
    %638 = vperm.xlu0 %637, %v352
    %v639 = vpop.permute.xlu0 %638
    %641 = vset.pattern.permute.xlu0 1
    %642 = vperm.xlu0 %641, %v356
    %v643 = vpop.permute.xlu0 %642
    %645 = vset.pattern.permute.xlu0 1
    %646 = vperm.xlu0 %645, %v360
    %v647 = vpop.permute.xlu0 %646
    %649 = vset.pattern.permute.xlu0 1
    %650 = vperm.xlu0 %649, %v364
    %v651 = vpop.permute.xlu0 %650
    %v653 = vmul.f32 %v591, %v99
    %v654 = vmul.f32 %v595, %v99
    %v655 = vmul.f32 %v599, %v99
    %v656 = vmul.f32 %v603, %v99
    %v657 = vmul.f32 %v607, %v99
    %v658 = vmul.f32 %v611, %v99
    %v659 = vmul.f32 %v615, %v99
    %v660 = vmul.f32 %v619, %v99
    %v661 = vmul.f32 %v623, %v99
    %v662 = vmul.f32 %v627, %v99
    %v663 = vmul.f32 %v631, %v99
    %v664 = vmul.f32 %v635, %v99
    %v665 = vmul.f32 %v639, %v99
    %v666 = vmul.f32 %v643, %v99
    %v667 = vmul.f32 %v647, %v99
    %v668 = vmul.f32 %v651, %v99
    %v669 = vadd.f32 %v573, %v653
    %v670 = vadd.f32 %v574, %v654
    %v671 = vadd.f32 %v575, %v655
    %v672 = vadd.f32 %v576, %v656
    %v673 = vadd.f32 %v577, %v657
    %v674 = vadd.f32 %v578, %v658
    %v675 = vadd.f32 %v579, %v659
    %v676 = vadd.f32 %v580, %v660
    %v677 = vadd.f32 %v581, %v661
    %v678 = vadd.f32 %v582, %v662
    %v679 = vadd.f32 %v583, %v663
    %v680 = vadd.f32 %v584, %v664
    %v681 = vadd.f32 %v585, %v665
    %v682 = vadd.f32 %v586, %v666
    %v683 = vadd.f32 %v587, %v667
    %v684 = vadd.f32 %v588, %v668
    %685 = vset.pattern.permute.xlu0 2
    %686 = vperm.xlu0 %685, %v304
    %v687 = vpop.permute.xlu0 %686
    %689 = vset.pattern.permute.xlu0 2
    %690 = vperm.xlu0 %689, %v308
    %v691 = vpop.permute.xlu0 %690
    %693 = vset.pattern.permute.xlu0 2
    %694 = vperm.xlu0 %693, %v312
    %v695 = vpop.permute.xlu0 %694
    %697 = vset.pattern.permute.xlu0 2
    %698 = vperm.xlu0 %697, %v316
    %v699 = vpop.permute.xlu0 %698
    %701 = vset.pattern.permute.xlu0 2
    %702 = vperm.xlu0 %701, %v320
    %v703 = vpop.permute.xlu0 %702
    %705 = vset.pattern.permute.xlu0 2
    %706 = vperm.xlu0 %705, %v324
    %v707 = vpop.permute.xlu0 %706
    %709 = vset.pattern.permute.xlu0 2
    %710 = vperm.xlu0 %709, %v328
    %v711 = vpop.permute.xlu0 %710
    %713 = vset.pattern.permute.xlu0 2
    %714 = vperm.xlu0 %713, %v332
    %v715 = vpop.permute.xlu0 %714
    %717 = vset.pattern.permute.xlu0 2
    %718 = vperm.xlu0 %717, %v336
    %v719 = vpop.permute.xlu0 %718
    %721 = vset.pattern.permute.xlu0 2
    %722 = vperm.xlu0 %721, %v340
    %v723 = vpop.permute.xlu0 %722
    %725 = vset.pattern.permute.xlu0 2
    %726 = vperm.xlu0 %725, %v344
    %v727 = vpop.permute.xlu0 %726
    %729 = vset.pattern.permute.xlu0 2
    %730 = vperm.xlu0 %729, %v348
    %v731 = vpop.permute.xlu0 %730
    %733 = vset.pattern.permute.xlu0 2
    %734 = vperm.xlu0 %733, %v352
    %v735 = vpop.permute.xlu0 %734
    %737 = vset.pattern.permute.xlu0 2
    %738 = vperm.xlu0 %737, %v356
    %v739 = vpop.permute.xlu0 %738
    %741 = vset.pattern.permute.xlu0 2
    %742 = vperm.xlu0 %741, %v360
    %v743 = vpop.permute.xlu0 %742
    %745 = vset.pattern.permute.xlu0 2
    %746 = vperm.xlu0 %745, %v364
    %v747 = vpop.permute.xlu0 %746
    %v749 = vmul.f32 %v687, %v100
    %v750 = vmul.f32 %v691, %v100
    %v751 = vmul.f32 %v695, %v100
    %v752 = vmul.f32 %v699, %v100
    %v753 = vmul.f32 %v703, %v100
    %v754 = vmul.f32 %v707, %v100
    %v755 = vmul.f32 %v711, %v100
    %v756 = vmul.f32 %v715, %v100
    %v757 = vmul.f32 %v719, %v100
    %v758 = vmul.f32 %v723, %v100
    %v759 = vmul.f32 %v727, %v100
    %v760 = vmul.f32 %v731, %v100
    %v761 = vmul.f32 %v735, %v100
    %v762 = vmul.f32 %v739, %v100
    %v763 = vmul.f32 %v743, %v100
    %v764 = vmul.f32 %v747, %v100
    %v765 = vadd.f32 %v669, %v749
    %v766 = vadd.f32 %v670, %v750
    %v767 = vadd.f32 %v671, %v751
    %v768 = vadd.f32 %v672, %v752
    %v769 = vadd.f32 %v673, %v753
    %v770 = vadd.f32 %v674, %v754
    %v771 = vadd.f32 %v675, %v755
    %v772 = vadd.f32 %v676, %v756
    %v773 = vadd.f32 %v677, %v757
    %v774 = vadd.f32 %v678, %v758
    %v775 = vadd.f32 %v679, %v759
    %v776 = vadd.f32 %v680, %v760
    %v777 = vadd.f32 %v681, %v761
    %v778 = vadd.f32 %v682, %v762
    %v779 = vadd.f32 %v683, %v763
    %v780 = vadd.f32 %v684, %v764
    %v781 = vmax.f32 %v765, 0.0
    %v782 = vmax.f32 %v766, 0.0
    %v783 = vmax.f32 %v767, 0.0
    %v784 = vmax.f32 %v768, 0.0
    %v785 = vmax.f32 %v769, 0.0
    %v786 = vmax.f32 %v770, 0.0
    %v787 = vmax.f32 %v771, 0.0
    %v788 = vmax.f32 %v772, 0.0
    %v789 = vmax.f32 %v773, 0.0
    %v790 = vmax.f32 %v774, 0.0
    %v791 = vmax.f32 %v775, 0.0
    %v792 = vmax.f32 %v776, 0.0
    %v793 = vmax.f32 %v777, 0.0
    %v794 = vmax.f32 %v778, 0.0
    %v795 = vmax.f32 %v779, 0.0
    %v796 = vmax.f32 %v780, 0.0
    %v797 = vmul.f32 %v781, %v39
    %v798 = vmul.f32 %v782, %v40
    %v799 = vmul.f32 %v783, %v41
    %v800 = vmul.f32 %v784, %v42
    %v801 = vmul.f32 %v785, %v43
    %v802 = vmul.f32 %v786, %v44
    %v803 = vmul.f32 %v787, %v45
    %v804 = vmul.f32 %v788, %v46
    %v805 = vmul.f32 %v789, %v47
    %v806 = vmul.f32 %v790, %v48
    %v807 = vmul.f32 %v791, %v49
    %v808 = vmul.f32 %v792, %v50
    %v809 = vmul.f32 %v793, %v51
    %v810 = vmul.f32 %v794, %v52
    %v811 = vmul.f32 %v795, %v53
    %v812 = vmul.f32 %v796, %v54
    %v813 = vrot.slane %v797, 4
    %v814 = vadd.f32 %v797, %v813
    %v815 = vrot.slane %v814, 2
    %v816 = vadd.f32 %v814, %v815
    %v817 = vrot.slane %v816, 1
    %v818 = vadd.f32 %v816, %v817
    %v819 = vrot.slane %v798, 4
    %v820 = vadd.f32 %v798, %v819
    %v821 = vrot.slane %v820, 2
    %v822 = vadd.f32 %v820, %v821
    %v823 = vrot.slane %v822, 1
    %v824 = vadd.f32 %v822, %v823
    %v825 = vrot.slane %v799, 4
    %v826 = vadd.f32 %v799, %v825
    %v827 = vrot.slane %v826, 2
    %v828 = vadd.f32 %v826, %v827
    %v829 = vrot.slane %v828, 1
    %v830 = vadd.f32 %v828, %v829
    %v831 = vrot.slane %v800, 4
    %v832 = vadd.f32 %v800, %v831
    %v833 = vrot.slane %v832, 2
    %v834 = vadd.f32 %v832, %v833
    %v835 = vrot.slane %v834, 1
    %v836 = vadd.f32 %v834, %v835
    %v837 = vrot.slane %v801, 4
    %v838 = vadd.f32 %v801, %v837
    %v839 = vrot.slane %v838, 2
    %v840 = vadd.f32 %v838, %v839
    %v841 = vrot.slane %v840, 1
    %v842 = vadd.f32 %v840, %v841
    %v843 = vrot.slane %v802, 4
    %v844 = vadd.f32 %v802, %v843
    %v845 = vrot.slane %v844, 2
    %v846 = vadd.f32 %v844, %v845
    %v847 = vrot.slane %v846, 1
    %v848 = vadd.f32 %v846, %v847
    %v849 = vrot.slane %v803, 4
    %v850 = vadd.f32 %v803, %v849
    %v851 = vrot.slane %v850, 2
    %v852 = vadd.f32 %v850, %v851
    %v853 = vrot.slane %v852, 1
    %v854 = vadd.f32 %v852, %v853
    %v855 = vrot.slane %v804, 4
    %v856 = vadd.f32 %v804, %v855
    %v857 = vrot.slane %v856, 2
    %v858 = vadd.f32 %v856, %v857
    %v859 = vrot.slane %v858, 1
    %v860 = vadd.f32 %v858, %v859
    %v861 = vrot.slane %v805, 4
    %v862 = vadd.f32 %v805, %v861
    %v863 = vrot.slane %v862, 2
    %v864 = vadd.f32 %v862, %v863
    %v865 = vrot.slane %v864, 1
    %v866 = vadd.f32 %v864, %v865
    %v867 = vrot.slane %v806, 4
    %v868 = vadd.f32 %v806, %v867
    %v869 = vrot.slane %v868, 2
    %v870 = vadd.f32 %v868, %v869
    %v871 = vrot.slane %v870, 1
    %v872 = vadd.f32 %v870, %v871
    %v873 = vrot.slane %v807, 4
    %v874 = vadd.f32 %v807, %v873
    %v875 = vrot.slane %v874, 2
    %v876 = vadd.f32 %v874, %v875
    %v877 = vrot.slane %v876, 1
    %v878 = vadd.f32 %v876, %v877
    %v879 = vrot.slane %v808, 4
    %v880 = vadd.f32 %v808, %v879
    %v881 = vrot.slane %v880, 2
    %v882 = vadd.f32 %v880, %v881
    %v883 = vrot.slane %v882, 1
    %v884 = vadd.f32 %v882, %v883
    %v885 = vrot.slane %v809, 4
    %v886 = vadd.f32 %v809, %v885
    %v887 = vrot.slane %v886, 2
    %v888 = vadd.f32 %v886, %v887
    %v889 = vrot.slane %v888, 1
    %v890 = vadd.f32 %v888, %v889
    %v891 = vrot.slane %v810, 4
    %v892 = vadd.f32 %v810, %v891
    %v893 = vrot.slane %v892, 2
    %v894 = vadd.f32 %v892, %v893
    %v895 = vrot.slane %v894, 1
    %v896 = vadd.f32 %v894, %v895
    %v897 = vrot.slane %v811, 4
    %v898 = vadd.f32 %v811, %v897
    %v899 = vrot.slane %v898, 2
    %v900 = vadd.f32 %v898, %v899
    %v901 = vrot.slane %v900, 1
    %v902 = vadd.f32 %v900, %v901
    %v903 = vrot.slane %v812, 4
    %v904 = vadd.f32 %v812, %v903
    %v905 = vrot.slane %v904, 2
    %v906 = vadd.f32 %v904, %v905
    %v907 = vrot.slane %v906, 1
    %v908 = vadd.f32 %v906, %v907
    %vm925 = vcmask 1041409
    %v926 = vsel %vm925, %v824, %v818
    %vm927 = vcmask 1042434
    %v928 = vsel %vm927, %v830, %v926
    %vm929 = vcmask 1043459
    %v930 = vsel %vm929, %v836, %v928
    %vm931 = vcmask 1044484
    %v932 = vsel %vm931, %v842, %v930
    %vm933 = vcmask 1045509
    %v934 = vsel %vm933, %v848, %v932
    %vm935 = vcmask 1046534
    %v936 = vsel %vm935, %v854, %v934
    %vm937 = vcmask 1047559
    %v938 = vsel %vm937, %v860, %v936
    %v939 = vsel %vm925, %v872, %v866
    %v940 = vsel %vm927, %v878, %v939
    %v941 = vsel %vm929, %v884, %v940
    %v942 = vsel %vm931, %v890, %v941
    %v943 = vsel %vm933, %v896, %v942
    %v944 = vsel %vm935, %v902, %v943
    %v945 = vsel %vm937, %v908, %v944
    %948 = vst [vmem:[#allocation5] sm:$0xff] %v938
    %949 = vst [vmem:[#allocation5 + $0x8] sm:$0xff] %v945
    // Predicated region
    $region26: #{tpu_custom_call.1} parent=1 // pred_check
      _
    $region27: #{tpu_custom_call.1} parent=1 // pred_check_branch
      %951 = sbr.rel (0) target = $region29
    $region28: #{tpu_custom_call.1} parent=1 // pred_region
      %s953 = ssub.s32 256, 256
      %954 = vsyncadd [#allocation4], %s953
      %s955 = sshll.u32 [#allocation5], 4
      %s956 = int_to_ptr.vmem [resolvable:$true] %s955
      %961 = dma.vmem_to_hbm [thread:$0]  %s956, 256, %s5, [#allocation4], 128, 128, 8
    $region29: #{tpu_custom_call.1} parent=1 // pred_fallthru
      _
    // Predicated region
    $region30: #{tpu_custom_call.1} parent=1 // pred_check
      _
    $region31: #{tpu_custom_call.1} parent=1 // pred_check_branch
      %963 = sbr.rel (0) target = $region33
    $region32: #{tpu_custom_call.1} parent=1 // pred_region
      %964 = dma.done [#allocation4], 256
    $region33: #{tpu_custom_call.1} parent=1 // pred_fallthru
      _
    %965 = vsyncpa [#allocation3], 1
    %966 = vsyncpa [#allocation4], 1

</llo_original>
